<compile_context>
chip_gen: v5e
topology: v5e:2x2
jax: 0.10.0
libtpu: 0.0.40
codegen_flags: <defaults>
</compile_context>

<pallas_src>
import functools

import jax
import jax.numpy as jnp
from jax.experimental import pallas as pl
from jax.experimental.pallas import tpu as pltpu


def _round_up(x, m):
    return (x + m - 1) // m * m


def _choose_block_rows(b, hw_padded, max_block_bytes=2 << 20):
    """Rows per block: multiple of 8 (sublane tile), sized so double-buffered
    input + output blocks stay far below the scoped VMEM limit on every
    generation (v5e/v6e/v7x)."""
    b8 = _round_up(b, 8)
    cap = max(8, (max_block_bytes // (hw_padded * 4)) // 8 * 8)
    tb = min(b8, cap, 1024)
    # Keep >= 2 grid steps when the batch allows it so both v7x TensorCores
    # receive work (harmless on single-TC v5e/v6e).
    if b8 >= 16 and b8 // tb < 2:
        tb = max(8, (b8 // 2) // 8 * 8)
    return tb


def cbam_block_kernel(sc_ref, mlp_ref, x_ref, o_ref, *, hw):
    """Fused CBAM_Block forward, specialized for C == 1.

    sc_ref : SMEM f32[8]   -> [c0w, c0b, sw0, sw1, sb, b2, 0, 0]
    mlp_ref: VMEM f32[3,F] -> rows: W1 (F,), b1 (F,), W2 (F,)
    x_ref  : VMEM f32[TB, HWp]  (batch rows on sublanes, padded H*W on lanes)
    """
    x = x_ref[...]                                        # (TB, HWp)

    c0w = sc_ref[0]
    c0b = sc_ref[1]
    sw0 = sc_ref[2]
    sw1 = sc_ref[3]
    sb = sc_ref[4]
    b2 = sc_ref[5]

    # --- first 1x1 conv (1 -> 1 channel): scalar scale + bias ---
    tmp = x * c0w + c0b                                   # (TB, HWp)

    # --- CBAM channel attention (C == 1 -> per-row scalar) ---
    hwp = tmp.shape[-1]
    if hwp != hw:
        # Lane padding present: mask it out of the pooled statistics.
        lane = jax.lax.broadcasted_iota(jnp.int32, tmp.shape, 1)
        valid = lane < hw
        mp = jnp.max(jnp.where(valid, tmp, -jnp.inf), axis=-1, keepdims=True)
        ap = jnp.sum(jnp.where(valid, tmp, 0.0), axis=-1,
                     keepdims=True) * (1.0 / hw)
    else:
        mp = jnp.max(tmp, axis=-1, keepdims=True)         # (TB, 1)
        ap = jnp.mean(tmp, axis=-1, keepdims=True)        # (TB, 1)

    w1 = mlp_ref[0:1, :]                                  # (1, F)
    b1 = mlp_ref[1:2, :]                                  # (1, F)
    w2 = mlp_ref[2:3, :]                                  # (1, F)

    def shared_mlp(v):                                    # v: (TB, 1)
        h = jnp.maximum(v * w1 + b1, 0.0)                 # (TB, F)  (C == 1)
        return jnp.sum(h * w2, axis=-1, keepdims=True) + b2   # (TB, 1)

    attn_c = jax.nn.sigmoid(shared_mlp(mp) + shared_mlp(ap))  # (TB, 1)
    t = tmp * attn_c                                      # (TB, HWp)

    # --- SAM spatial attention + residual, fused ---
    # With C == 1 the channel-wise max and mean are identities, so the 1x1
    # conv over [max, mean] collapses to (sw0 + sw1) * t + sb.
    attn_s = jax.nn.sigmoid((sw0 + sw1) * t + sb)         # (TB, HWp)
    o_ref[...] = attn_s * t + x


def cbam_block(x, params):
    """x: (B, 1, H, W) float32 NCHW (Conv2d(1, 1, 1) forces a single channel)."""
    c0w, c0b, w1, b1, w2, b2, sw0, sw1, sb = params
    B, C, H, W = x.shape
    assert C == 1, "CBAM_Block's Conv2d(1, 1, 1) requires a single input channel"
    HW = H * W
    F = w1.shape[0]

    hwp = _round_up(HW, 128)          # lane-dense last dim (unmasked stores)
    tb = _choose_block_rows(B, hwp)   # batch rows on sublanes (multiple of 8)
    bp = _round_up(B, tb)

    x_flat = x.reshape(B, HW).astype(jnp.float32)
    x_pad = jnp.pad(x_flat, ((0, bp - B), (0, hwp - HW)))

    # All (1,1) conv weights/biases + scalar MLP output bias in one SMEM array.
    scalars = jnp.concatenate([
        c0w.reshape(1), c0b.reshape(1), sw0.reshape(1), sw1.reshape(1),
        sb.reshape(1), b2.reshape(1), jnp.zeros((2,), jnp.float32),
    ]).astype(jnp.float32)                                # (8,)

    # Shared-MLP weights consolidated into one small VMEM block (C == 1).
    mlp_w = jnp.stack(
        [w1.reshape(F), b1.reshape(F), w2.reshape(F)], axis=0
    ).astype(jnp.float32)                                 # (3, F)

    kernel = functools.partial(cbam_block_kernel, hw=HW)

    out = pl.pallas_call(
        kernel,
        out_shape=jax.ShapeDtypeStruct((bp, hwp), jnp.float32),
        grid_spec=pltpu.PrefetchScalarGridSpec(
            num_scalar_prefetch=0,
            grid=(bp // tb,),
            in_specs=[
                pl.BlockSpec(memory_space=pltpu.MemorySpace.SMEM),  # scalars
                pl.BlockSpec((3, F), lambda i: (0, 0)),             # MLP weights
                pl.BlockSpec((tb, hwp), lambda i: (i, 0)),          # x
            ],
            out_specs=pl.BlockSpec((tb, hwp), lambda i: (i, 0)),
        ),
        compiler_params=pltpu.CompilerParams(
            dimension_semantics=("parallel",)),
    )(scalars, mlp_w, x_pad)

    return out[:B, :HW].reshape(B, C, H, W)


def cbam_block_ref(x, params):
    """Pure-JAX reference matching the PyTorch forward exactly."""
    c0w, c0b, w1, b1, w2, b2, sw0, sw1, sb = params
    B, C, H, W = x.shape
    F = w1.shape[0]
    tmp = x * c0w + c0b
    mp = jnp.max(tmp, axis=(2, 3))                        # (B, C)
    ap = jnp.mean(tmp, axis=(2, 3))                       # (B, C)

    def mlp(v):
        h = jax.nn.relu(v @ w1.T + b1.reshape(F))
        return h @ w2.T + b2.reshape(C)

    attn = jax.nn.sigmoid(mlp(mp) + mlp(ap))[:, :, None, None]
    t = tmp * attn
    mx = jnp.max(t, axis=1, keepdims=True)
    mn = jnp.mean(t, axis=1, keepdims=True)
    s = jax.nn.sigmoid(sw0 * mx + sw1 * mn + sb)
    t = s * t
    return t + x


if __name__ == "__main__":
    # Shapes implied by the module: Conv2d(1, 1, 1) forces input_channel = 1.
    input_channel, filter_channel = 1, 8

    key = jax.random.PRNGKey(0)
    keys = jax.random.split(key, 10)

    params = (
        jax.random.normal(keys[1], (1, 1), jnp.float32) * 0.5,               # conv0 w
        jax.random.normal(keys[2], (1, 1), jnp.float32) * 0.1,               # conv0 b
        jax.random.normal(keys[3], (filter_channel, input_channel)) * 0.5,   # W1
        jax.random.normal(keys[4], (1, filter_channel)) * 0.1,               # b1
        jax.random.normal(keys[5], (input_channel, filter_channel)) * 0.5,   # W2
        jax.random.normal(keys[6], (1, input_channel)) * 0.1,                # b2
        jax.random.normal(keys[7], (1, 1), jnp.float32) * 0.5,               # sam w (max)
        jax.random.normal(keys[8], (1, 1), jnp.float32) * 0.5,               # sam w (avg)
        jax.random.normal(keys[9], (1, 1), jnp.float32) * 0.1,               # sam b
    )
    params = tuple(p.astype(jnp.float32) for p in params)

    # Case 1: lane-dense H*W (16*16 = 256, multiple of 128), small batch.
    x1 = jax.random.normal(keys[0], (2, 1, 16, 16), dtype=jnp.float32)
    out1 = jax.block_until_ready(cbam_block(x1, params))
    ref1 = jax.block_until_ready(cbam_block_ref(x1, params))
    assert out1.shape == x1.shape
    assert jnp.allclose(out1, ref1, atol=1e-5, rtol=1e-5), (
        f"max abs diff {jnp.max(jnp.abs(out1 - ref1))}")

    # Case 2: exercises batch-row padding and lane masking (10*10 = 100).
    x2 = jax.random.normal(jax.random.PRNGKey(1), (3, 1, 10, 10),
                           dtype=jnp.float32)
    out2 = jax.block_until_ready(cbam_block(x2, params))
    ref2 = jax.block_until_ready(cbam_block_ref(x2, params))
    assert out2.shape == x2.shape
    assert jnp.allclose(out2, ref2, atol=1e-5, rtol=1e-5), (
        f"max abs diff {jnp.max(jnp.abs(out2 - ref2))}")

    print("KERNEL_OK")
</pallas_src>

<mosaic_0001>
module attributes {stable_mosaic.version = 11 : i64} {
  func.func @cbam_block_kernel(%arg0: i32, %arg1: memref<8xf32, #tpu.memory_space<smem>>, %arg2: memref<3x8xf32, #tpu.memory_space<vmem>>, %arg3: memref<8x256xf32, #tpu.memory_space<vmem>>, %arg4: memref<8x256xf32, #tpu.memory_space<vmem>>) attributes {dimension_semantics = [#tpu.dimension_semantics<parallel>], iteration_bounds = array<i64: 1>, scalar_prefetch = 0 : i64, scratch_operands = 0 : i64, tpu.core_type = #tpu.core_type<tc>, window_params = [{transform_indices = @transform_0, window_bounds = array<i64: 8>}, {pipeline_mode = #tpu.pipeline_mode<synchronous>, transform_indices = @transform_1, window_bounds = array<i64: 3, 8>}, {transform_indices = @transform_2, window_bounds = array<i64: 8, 256>}, {transform_indices = @transform_3, window_bounds = array<i64: 8, 256>}]} {
    %c0 = arith.constant 0 : index
    %c0_0 = arith.constant 0 : index
    %0 = vector.load %arg3[%c0, %c0_0] : memref<8x256xf32, #tpu.memory_space<vmem>>, vector<8x256xf32>
    %c0_1 = arith.constant 0 : index
    %1 = memref.load %arg1[%c0_1] : memref<8xf32, #tpu.memory_space<smem>>
    %c1 = arith.constant 1 : index
    %2 = memref.load %arg1[%c1] : memref<8xf32, #tpu.memory_space<smem>>
    %c2 = arith.constant 2 : index
    %3 = memref.load %arg1[%c2] : memref<8xf32, #tpu.memory_space<smem>>
    %c3 = arith.constant 3 : index
    %4 = memref.load %arg1[%c3] : memref<8xf32, #tpu.memory_space<smem>>
    %c4 = arith.constant 4 : index
    %5 = memref.load %arg1[%c4] : memref<8xf32, #tpu.memory_space<smem>>
    %c5 = arith.constant 5 : index
    %6 = memref.load %arg1[%c5] : memref<8xf32, #tpu.memory_space<smem>>
    %7 = vector.broadcast %1 : f32 to vector<8x256xf32>
    %8 = arith.mulf %0, %7 : vector<8x256xf32>
    %9 = vector.broadcast %2 : f32 to vector<8x256xf32>
    %10 = arith.addf %8, %9 : vector<8x256xf32>
    %cst = arith.constant dense<0xFF800000> : vector<8xf32>
    %11 = vector.multi_reduction <maximumf>, %10, %cst [1] : vector<8x256xf32> to vector<8xf32>
    %12 = vector.shape_cast %11 : vector<8xf32> to vector<8x1xf32>
    %cst_2 = arith.constant dense<0.000000e+00> : vector<8xf32>
    %13 = vector.multi_reduction <add>, %10, %cst_2 [1] : vector<8x256xf32> to vector<8xf32>
    %14 = vector.shape_cast %13 : vector<8xf32> to vector<8x1xf32>
    %cst_3 = arith.constant 2.560000e+02 : f32
    %15 = vector.broadcast %cst_3 : f32 to vector<8x1xf32>
    %16 = arith.divf %14, %15 : vector<8x1xf32>
    %c0_4 = arith.constant 0 : index
    %c0_5 = arith.constant 0 : index
    %17 = vector.load %arg2[%c0_4, %c0_5] : memref<3x8xf32, #tpu.memory_space<vmem>>, vector<1x8xf32>
    %c1_6 = arith.constant 1 : index
    %c0_7 = arith.constant 0 : index
    %18 = vector.load %arg2[%c1_6, %c0_7] : memref<3x8xf32, #tpu.memory_space<vmem>>, vector<1x8xf32>
    %c2_8 = arith.constant 2 : index
    %c0_9 = arith.constant 0 : index
    %19 = vector.load %arg2[%c2_8, %c0_9] : memref<3x8xf32, #tpu.memory_space<vmem>>, vector<1x8xf32>
    %20 = vector.broadcast %12 : vector<8x1xf32> to vector<8x8xf32>
    %21 = vector.broadcast %17 : vector<1x8xf32> to vector<8x8xf32>
    %22 = arith.mulf %20, %21 : vector<8x8xf32>
    %23 = vector.broadcast %18 : vector<1x8xf32> to vector<8x8xf32>
    %24 = arith.addf %22, %23 : vector<8x8xf32>
    %cst_10 = arith.constant 0.000000e+00 : f32
    %25 = vector.broadcast %cst_10 : f32 to vector<8x8xf32>
    %26 = arith.maximumf %24, %25 : vector<8x8xf32>
    %27 = vector.broadcast %19 : vector<1x8xf32> to vector<8x8xf32>
    %28 = arith.mulf %26, %27 : vector<8x8xf32>
    %cst_11 = arith.constant dense<0.000000e+00> : vector<8xf32>
    %29 = vector.multi_reduction <add>, %28, %cst_11 [1] : vector<8x8xf32> to vector<8xf32>
    %30 = vector.shape_cast %29 : vector<8xf32> to vector<8x1xf32>
    %31 = vector.broadcast %6 : f32 to vector<8x1xf32>
    %32 = arith.addf %30, %31 : vector<8x1xf32>
    %33 = vector.broadcast %16 : vector<8x1xf32> to vector<8x8xf32>
    %34 = vector.broadcast %17 : vector<1x8xf32> to vector<8x8xf32>
    %35 = arith.mulf %33, %34 : vector<8x8xf32>
    %36 = vector.broadcast %18 : vector<1x8xf32> to vector<8x8xf32>
    %37 = arith.addf %35, %36 : vector<8x8xf32>
    %cst_12 = arith.constant 0.000000e+00 : f32
    %38 = vector.broadcast %cst_12 : f32 to vector<8x8xf32>
    %39 = arith.maximumf %37, %38 : vector<8x8xf32>
    %40 = vector.broadcast %19 : vector<1x8xf32> to vector<8x8xf32>
    %41 = arith.mulf %39, %40 : vector<8x8xf32>
    %cst_13 = arith.constant dense<0.000000e+00> : vector<8xf32>
    %42 = vector.multi_reduction <add>, %41, %cst_13 [1] : vector<8x8xf32> to vector<8xf32>
    %43 = vector.shape_cast %42 : vector<8xf32> to vector<8x1xf32>
    %44 = vector.broadcast %6 : f32 to vector<8x1xf32>
    %45 = arith.addf %43, %44 : vector<8x1xf32>
    %46 = arith.addf %32, %45 : vector<8x1xf32>
    %47 = arith.negf %46 : vector<8x1xf32>
    %48 = math.exp %47 : vector<8x1xf32>
    %cst_14 = arith.constant 1.000000e+00 : f32
    %49 = vector.broadcast %cst_14 : f32 to vector<8x1xf32>
    %50 = arith.addf %49, %48 : vector<8x1xf32>
    %51 = arith.divf %49, %50 : vector<8x1xf32>
    %52 = vector.broadcast %51 : vector<8x1xf32> to vector<8x256xf32>
    %53 = arith.mulf %10, %52 : vector<8x256xf32>
    %54 = arith.addf %3, %4 : f32
    %55 = vector.broadcast %54 : f32 to vector<8x256xf32>
    %56 = arith.mulf %55, %53 : vector<8x256xf32>
    %57 = vector.broadcast %5 : f32 to vector<8x256xf32>
    %58 = arith.addf %56, %57 : vector<8x256xf32>
    %59 = arith.negf %58 : vector<8x256xf32>
    %60 = math.exp %59 : vector<8x256xf32>
    %cst_15 = arith.constant 1.000000e+00 : f32
    %61 = vector.broadcast %cst_15 : f32 to vector<8x256xf32>
    %62 = arith.addf %61, %60 : vector<8x256xf32>
    %63 = arith.divf %61, %62 : vector<8x256xf32>
    %64 = arith.mulf %63, %53 : vector<8x256xf32>
    %65 = arith.addf %64, %0 : vector<8x256xf32>
    %c0_16 = arith.constant 0 : index
    %c0_17 = arith.constant 0 : index
    %66 = vector.load %arg4[%c0_16, %c0_17] : memref<8x256xf32, #tpu.memory_space<vmem>>, vector<8x256xf32>
    tpu.vector_store %arg4[%c0_16, %c0_17], %65 {strides = array<i32>} : memref<8x256xf32, #tpu.memory_space<vmem>>, vector<8x256xf32>,
    return
  }
  func.func @transform_0(%arg0: i32) -> i32 {
    %c0_i32 = arith.constant 0 : i32
    %c0_i32_0 = arith.constant 0 : i32
    return %c0_i32 : i32
  }
  func.func @transform_1(%arg0: i32) -> (i32, i32) {
    %c0_i32 = arith.constant 0 : i32
    %c0_i32_0 = arith.constant 0 : i32
    %c0_i32_1 = arith.constant 0 : i32
    return %c0_i32, %c0_i32_0 : i32, i32
  }
  func.func @transform_2(%arg0: i32) -> (i32, i32) {
    %c0_i32 = arith.constant 0 : i32
    %c0_i32_0 = arith.constant 0 : i32
    return %arg0, %c0_i32 : i32, i32
  }
  func.func @transform_3(%arg0: i32) -> (i32, i32) {
    %c0_i32 = arith.constant 0 : i32
    %c0_i32_0 = arith.constant 0 : i32
    return %arg0, %c0_i32 : i32, i32
  }
}

</mosaic_0001>

<llo_original>
// kernel: tpu_custom_call.1
$region0: #{tpu_custom_call.1}
  #allocation0 [shape = 'u32[]', space=smem, size = 0x4, offset = 0x4, fixed_abs, tag = 'smem constant byte address 0x4 - core index']
  #allocation1 [shape = 'u32[72,128]{1,0:T(1,128)}', space=vmem, size = 0x9000, scoped, tag = 'internal scratch']
  %s0 = inlined_call_operand.hbm [shape: f32[8], index: 0, kind: input, shape index: {}]
  %s1 = inlined_call_operand.hbm [shape: f32[3,8], index: 1, kind: input, shape index: {}]
  %s2 = inlined_call_operand.hbm [shape: f32[8,256], index: 2, kind: input, shape index: {}]
  %s3 = inlined_call_operand.hbm [shape: f32[8,256], index: 3, kind: output, shape index: {}]
  %s4 = sld [smem:[#allocation0]]
  $region34: #{tpu_custom_call.1} parent=0
    _
  %s6 = ssub.s32 1, %s4
  %s7 = scalar_select 0, %s6, %s4
  $region1: #{tpu_custom_call.1} parent=0
    #allocation2 [shape = 'u8[512]{0}', space=smem, size = 0x200, scoped, tag = 'input window, operand 0, single buffered']
    #allocation3 [shape = 's32[1]{0}', space=sflag, size = 0x4, scoped, tag = 'scoped memory for tpu_custom_call.1']
    #allocation4 [shape = 's32[1]{0}', space=sflag, size = 0x4, scoped, tag = 'scoped memory for tpu_custom_call.1']
    #allocation5 [shape = 's32[1]{0}', space=sflag, size = 0x4, scoped, tag = 'scoped memory for tpu_custom_call.1']
    #allocation6 [shape = 'u8[2048]{0}', space=vmem, size = 0x800, scoped, tag = 'input window, operand 1, single buffered']
    #allocation7 [shape = 'u8[8192]{0}', space=vmem, size = 0x2000, scoped, tag = 'input window, operand 2, single buffered']
    #allocation8 [shape = 's32[1]{0}', space=sflag, size = 0x4, scoped, tag = 'scoped memory for tpu_custom_call.1']
    #allocation9 [shape = 'u8[8192]{0}', space=vmem, size = 0x2000, scoped, tag = 'output window, operand 0, single buffered']
    %8 = vsyncpa [#allocation5], 0
    %9 = vsyncpa [#allocation3], 0
    %10 = vsyncpa [#allocation8], 0
    %11 = vsyncpa [#allocation4], 0
    // Predicated region
    $region2: #{tpu_custom_call.1} parent=1 // pred_check
      _
    $region3: #{tpu_custom_call.1} parent=1 // pred_check_branch
      %13 = sbr.rel (0) target = $region5
    $region4: #{tpu_custom_call.1} parent=1 // pred_region
      %15 = vsyncadd [#allocation5], 0
      %s17 = sshll.u32 %s0, 4
      %s18 = int_to_ptr.hbm [resolvable:$true] %s17
      %20 = dma.hbm_to_smem %s18, 16, [#allocation2], [#allocation5]
    $region5: #{tpu_custom_call.1} parent=1 // pred_fallthru
      _
    // Predicated region
    $region6: #{tpu_custom_call.1} parent=1 // pred_check
      _
    $region7: #{tpu_custom_call.1} parent=1 // pred_check_branch
      %22 = sbr.rel (0) target = $region9
    $region8: #{tpu_custom_call.1} parent=1 // pred_region
      %24 = vsyncadd [#allocation3], 0
      %s26 = sshll.u32 %s1, 4
      %s27 = int_to_ptr.hbm [resolvable:$true] %s26
      %s28 = sshll.u32 [#allocation6], 4
      %s29 = int_to_ptr.vmem [resolvable:$true] %s28
      %31 = dma.hbm_to_vmem [thread:$0]  %s27, 64, %s29, [#allocation3]
    $region9: #{tpu_custom_call.1} parent=1 // pred_fallthru
      _
    // Predicated region
    $region10: #{tpu_custom_call.1} parent=1 // pred_check
      _
    $region11: #{tpu_custom_call.1} parent=1 // pred_check_branch
      %33 = sbr.rel (0) target = $region13
    $region12: #{tpu_custom_call.1} parent=1 // pred_region
      %35 = vsyncadd [#allocation8], 0
      %s37 = sshll.u32 %s2, 4
      %s38 = int_to_ptr.hbm [resolvable:$true] %s37
      %s39 = sshll.u32 [#allocation7], 4
      %s40 = int_to_ptr.vmem [resolvable:$true] %s39
      %42 = dma.hbm_to_vmem [thread:$0]  %s38, 256, %s40, [#allocation8]
    $region13: #{tpu_custom_call.1} parent=1 // pred_fallthru
      _
    // Predicated region
    $region14: #{tpu_custom_call.1} parent=1 // pred_check
      _
    $region15: #{tpu_custom_call.1} parent=1 // pred_check_branch
      %44 = sbr.rel (0) target = $region17
    $region16: #{tpu_custom_call.1} parent=1 // pred_region
      %46 = dma.done [#allocation5], 16
    $region17: #{tpu_custom_call.1} parent=1 // pred_fallthru
      _
    // Predicated region
    $region18: #{tpu_custom_call.1} parent=1 // pred_check
      _
    $region19: #{tpu_custom_call.1} parent=1 // pred_check_branch
      %48 = sbr.rel (0) target = $region21
    $region20: #{tpu_custom_call.1} parent=1 // pred_region
      %50 = dma.done [#allocation3], 64
    $region21: #{tpu_custom_call.1} parent=1 // pred_fallthru
      _
    // Predicated region
    $region22: #{tpu_custom_call.1} parent=1 // pred_check
      _
    $region23: #{tpu_custom_call.1} parent=1 // pred_check_branch
      %52 = sbr.rel (0) target = $region25
    $region24: #{tpu_custom_call.1} parent=1 // pred_region
      %54 = dma.done [#allocation8], 256
    $region25: #{tpu_custom_call.1} parent=1 // pred_fallthru
      _
    %55 = sfence
    %v56 = vld [vmem:[#allocation7] sm:$0xff]
    %v57 = vld [vmem:[#allocation7 + $0x8] sm:$0xff]
    %s58 = sld [smem:[#allocation2]]
    %s59 = sld [smem:[#allocation2 + $0x1]]
    %s60 = sld [smem:[#allocation2 + $0x2]]
    %s61 = sld [smem:[#allocation2 + $0x3]]
    %s62 = sld [smem:[#allocation2 + $0x4]]
    %s63 = sld [smem:[#allocation2 + $0x5]]
    %v64 = vstv %s58
    %v65 = vmul.f32 %v56, %v64
    %v66 = vmul.f32 %v57, %v64
    %v67 = vstv %s59
    %v68 = vadd.f32 %v65, %v67
    %v69 = vadd.f32 %v66, %v67
    %v70 = vmax.f32 %v68, %v69
    %71 = vmax.xlane.f32.xlu0 %v70
    %v72 = vpop.xlane.xlu0 %71
    %v73 = vadd.f32 %v68, %v69
    %74 = vadd.xlane.f32.xlu0 %v73
    %v75 = vpop.xlane.xlu0 %74
    %v76 = vrcp.pop 256.0
    %v77 = vmul.f32 256.0, %v76
    %v78 = vsub.f32 1.0, %v77
    %v79 = vmul.f32 %v76, %v78
    %v80 = vadd.f32 %v76, %v79
    %vm81 = vweird.f32 %v76
    %v82 = vsel %vm81, %v76, %v80
    %v83 = vmul.f32 %v75, %v82
    %v84 = vld [vmem:[#allocation6] sm:$0x1]
    %v85 = vld [vmem:[#allocation6 + $0x1] sm:$0x1]
    %v86 = vld [vmem:[#allocation6 + $0x2] sm:$0x1]
    %v87 = vperm.slane %v84, 0
    %v88 = vmul.f32 %v72, %v87
    %v89 = vperm.slane %v85, 0
    %v90 = vadd.f32 %v88, %v89
    %v91 = vmax.f32 %v90, 0.0
    %v92 = vperm.slane %v86, 0
    %v93 = vmul.f32 %v91, %v92
    %vm94 = vcmask 64512
    %v95 = vsel %vm94, %v93, 0.0
    %96 = vadd.xlane.f32.xlu0 %v95
    %v97 = vpop.xlane.xlu0 %96
    %v98 = vstv %s63
    %v99 = vadd.f32 %v97, %v98
    %v100 = vmul.f32 %v83, %v87
    %v101 = vadd.f32 %v100, %v89
    %v102 = vmax.f32 %v101, 0.0
    %v103 = vmul.f32 %v102, %v92
    %v104 = vsel %vm94, %v103, 0.0
    %105 = vadd.xlane.f32.xlu0 %v104
    %v106 = vpop.xlane.xlu0 %105
    %v107 = vadd.f32 %v106, %v98
    %v108 = vadd.f32 %v99, %v107
    %v109 = vxor.u32 %v108, 2147483648
    %v110 = vmul.f32 %v109, 1.442695
    %v111 = vpow.pop %v110
    %v112 = vadd.f32 %v111, 1.0
    %v113 = vrcp.pop %v112
    %v114 = vmul.f32 %v112, %v113
    %v115 = vsub.f32 1.0, %v114
    %v116 = vmul.f32 %v113, %v115
    %v117 = vadd.f32 %v113, %v116
    %vm118 = vweird.f32 %v112
    %vm119 = vweird.f32 %v113
    %vm120 = vmor %vm118, %vm119
    %v121 = vsel %vm120, %v113, %v117
    %v122 = vand.u32 2147483647, %v112
    %vm123 = vcmp.eq.f32.partialorder %v122, 8.507059e+37
    %v124 = vand.u32 %v112, 2147483648
    %v125 = vor.u32 1.1754944e-38, %v124
    %v126 = vsel %vm123, %v125, %v121
    %v127 = vmul.f32 1.0, %v126
    %v128 = vmul.f32 %v68, %v127
    %v129 = vmul.f32 %v69, %v127
    %s130 = sadd.f32 %s60, %s61
    %v131 = vstv %s130
    %v132 = vmul.f32 %v131, %v128
    %v133 = vmul.f32 %v131, %v129
    %v134 = vstv %s62
    %v135 = vadd.f32 %v132, %v134
    %v136 = vadd.f32 %v133, %v134
    %v137 = vxor.u32 %v135, 2147483648
    %v138 = vxor.u32 %v136, 2147483648
    %v139 = vmul.f32 %v137, 1.442695
    %v140 = vpow.pop %v139
    %v141 = vmul.f32 %v138, 1.442695
    %v142 = vpow.pop %v141
    %v143 = vadd.f32 %v140, 1.0
    %v144 = vadd.f32 %v142, 1.0
    %v145 = vrcp.pop %v143
    %v146 = vmul.f32 %v143, %v145
    %v147 = vsub.f32 1.0, %v146
    %v148 = vmul.f32 %v145, %v147
    %v149 = vadd.f32 %v145, %v148
    %vm150 = vweird.f32 %v143
    %vm151 = vweird.f32 %v145
    %vm152 = vmor %vm150, %vm151
    %v153 = vsel %vm152, %v145, %v149
    %v154 = vand.u32 2147483647, %v143
    %vm155 = vcmp.eq.f32.partialorder %v154, 8.507059e+37
    %v156 = vand.u32 %v143, 2147483648
    %v157 = vor.u32 1.1754944e-38, %v156
    %v158 = vsel %vm155, %v157, %v153
    %v159 = vmul.f32 1.0, %v158
    %v160 = vrcp.pop %v144
    %v161 = vmul.f32 %v144, %v160
    %v162 = vsub.f32 1.0, %v161
    %v163 = vmul.f32 %v160, %v162
    %v164 = vadd.f32 %v160, %v163
    %vm165 = vweird.f32 %v144
    %vm166 = vweird.f32 %v160
    %vm167 = vmor %vm165, %vm166
    %v168 = vsel %vm167, %v160, %v164
    %v169 = vand.u32 2147483647, %v144
    %vm170 = vcmp.eq.f32.partialorder %v169, 8.507059e+37
    %v171 = vand.u32 %v144, 2147483648
    %v172 = vor.u32 1.1754944e-38, %v171
    %v173 = vsel %vm170, %v172, %v168
    %v174 = vmul.f32 1.0, %v173
    %v175 = vmul.f32 %v159, %v128
    %v176 = vmul.f32 %v174, %v129
    %v177 = vadd.f32 %v175, %v56
    %v178 = vadd.f32 %v176, %v57
    %179 = vst [vmem:[#allocation9] sm:$0xff] %v177
    %180 = vst [vmem:[#allocation9 + $0x8] sm:$0xff] %v178
    // Predicated region
    $region26: #{tpu_custom_call.1} parent=1 // pred_check
      _
    $region27: #{tpu_custom_call.1} parent=1 // pred_check_branch
      %182 = sbr.rel (0) target = $region29
    $region28: #{tpu_custom_call.1} parent=1 // pred_region
      %184 = vsyncadd [#allocation4], 0
      %s186 = sshll.u32 [#allocation9], 4
      %s187 = int_to_ptr.vmem [resolvable:$true] %s186
      %s188 = sshll.u32 %s3, 4
      %s189 = int_to_ptr.hbm [resolvable:$true] %s188
      %191 = dma.vmem_to_hbm [thread:$0]  %s187, 256, %s189, [#allocation4]
    $region29: #{tpu_custom_call.1} parent=1 // pred_fallthru
      _
    // Predicated region
    $region30: #{tpu_custom_call.1} parent=1 // pred_check
      _
    $region31: #{tpu_custom_call.1} parent=1 // pred_check_branch
      %193 = sbr.rel (0) target = $region33
    $region32: #{tpu_custom_call.1} parent=1 // pred_region
      %195 = dma.done [#allocation4], 256
    $region33: #{tpu_custom_call.1} parent=1 // pred_fallthru
      _
    %196 = vsyncpa [#allocation3], 1
    %197 = vsyncpa [#allocation8], 1
    %198 = vsyncpa [#allocation4], 1
    %199 = vsyncpa [#allocation5], 1

</llo_original>
